<compile_context>
chip_gen: v6e
topology: v6e:2x2x1
jax: 0.10.0
libtpu: 0.0.40
codegen_flags: <defaults>
</compile_context>

<pallas_src>
import functools
import math

import jax
import jax.numpy as jnp
from jax.experimental import pallas as pl
from jax.experimental.pallas import tpu as pltpu

# Well above this kernel's per-tile needs, and safe headroom on every
# generation (v5e/v6e: 128 MiB physical; v7x: 64 MiB per TensorCore).
_VMEM_LIMIT_BYTES = 48 * 1024 * 1024


def _round_up(x, m):
    return ((x + m - 1) // m) * m


# ---------------- one LightGCN propagation layer (k-tiled) ----------------
def _prop_kernel(adj_ref, e_ref, acc_ref, e_next_ref, acc_out_ref, mxu_acc):
    """e_next[row_tile] = A[row_tile, :] @ E  (bf16 MXU, f32 acc);  acc += e_next."""
    k = pl.program_id(1)

    @pl.when(k == 0)
    def _():
        mxu_acc[...] = jnp.zeros_like(mxu_acc)

    mxu_acc[...] += jnp.dot(adj_ref[...], e_ref[...],
                            preferred_element_type=jnp.float32)

    @pl.when(k == pl.num_programs(1) - 1)
    def _():
        nxt = mxu_acc[...]
        acc_out_ref[...] = acc_ref[...] + nxt                 # f32 layer-sum
        e_next_ref[...] = nxt.astype(e_next_ref.dtype)        # bf16 for next layer


# -------- last propagation layer fused with layer-mean + linear head --------
def _prop_head_kernel(adj_ref, e_ref, acc_ref, wt_ref, b_ref,
                      e_mean_ref, s_ref, mxu_acc, *, inv_layers):
    k = pl.program_id(1)

    @pl.when(k == 0)
    def _():
        mxu_acc[...] = jnp.zeros_like(mxu_acc)

    mxu_acc[...] += jnp.dot(adj_ref[...], e_ref[...],
                            preferred_element_type=jnp.float32)

    @pl.when(k == pl.num_programs(1) - 1)
    def _():
        e_mean = (acc_ref[...] + mxu_acc[...]) * inv_layers   # f32
        e_mean_ref[...] = e_mean
        # nn.Linear: y = x @ W^T + b; W^T pre-transposed + bf16 in the wrapper.
        s_ref[...] = (jnp.dot(e_mean.astype(wt_ref.dtype), wt_ref[...],
                              preferred_element_type=jnp.float32) + b_ref[...])


# ---------------- head only (used when n_layers == 0) ----------------
def _head_kernel(acc_ref, wt_ref, b_ref, e_ref, s_ref, *, inv_layers):
    e_mean = acc_ref[...] * inv_layers
    e_ref[...] = e_mean
    s_ref[...] = (jnp.dot(e_mean.astype(wt_ref.dtype), wt_ref[...],
                          preferred_element_type=jnp.float32) + b_ref[...])


def semigcn_forward(norm_adj, e0, fc_w, fc_b, *, n_users, n_layers,
                    tm=None, tk=None):
    """Returns (e_su, e_si, su, si) exactly like SemiGCN.forward()."""
    N, D = e0.shape
    C = fc_w.shape[0]

    # Tile sizes: 128-multiples everywhere (lane-dense stores, (8,128) tiling).
    # tm is conservative so per-TensorCore VMEM fits comfortably on v7x; raise
    # tm/tk on v6e (128 MiB VMEM) if profiling shows per-step overhead.
    if tm is None:
        tm = 256 if N >= 256 else _round_up(max(N, 8), 128)
    if tk is None:
        tk = tm
    N_pad = _round_up(N, math.lcm(tm, tk))
    D_pad = _round_up(max(D, 128), 128)
    C_pad = _round_up(max(C, 128), 128)
    n_row_tiles = N_pad // tm
    n_k_tiles = N_pad // tk

    # Padded operands.  Adjacency is written straight into a bf16 buffer (no
    # f32 (N_pad, N_pad) intermediate).
    adj_bf16 = (jnp.zeros((N_pad, N_pad), jnp.bfloat16)
                .at[:N, :N].set(norm_adj.astype(jnp.bfloat16)))
    e0_p = jnp.zeros((N_pad, D_pad), jnp.float32).at[:N, :D].set(e0)
    wt_bf16 = (jnp.zeros((D_pad, C_pad), jnp.bfloat16)
               .at[:D, :C].set(fc_w.T.astype(jnp.bfloat16)))
    b_p = jnp.zeros((1, C_pad), jnp.float32).at[0, :C].set(fc_b)

    cparams = pltpu.CompilerParams(
        dimension_semantics=("parallel", "arbitrary"),
        vmem_limit_bytes=_VMEM_LIMIT_BYTES)
    inv_layers = 1.0 / float(n_layers + 1)

    prop_call = pl.pallas_call(
        _prop_kernel,
        out_shape=(
            jax.ShapeDtypeStruct((N_pad, D_pad), jnp.bfloat16),   # e_next
            jax.ShapeDtypeStruct((N_pad, D_pad), jnp.float32),    # acc (updated)
        ),
        grid=(n_row_tiles, n_k_tiles),
        in_specs=[
            pl.BlockSpec((tm, tk), lambda i, k: (i, k)),          # adjacency tile
            pl.BlockSpec((tk, D_pad), lambda i, k: (k, 0)),       # E k-slab
            pl.BlockSpec((tm, D_pad), lambda i, k: (i, 0)),       # acc row tile
        ],
        out_specs=(
            pl.BlockSpec((tm, D_pad), lambda i, k: (i, 0)),
            pl.BlockSpec((tm, D_pad), lambda i, k: (i, 0)),
        ),
        scratch_shapes=[pltpu.VMEM((tm, D_pad), jnp.float32)],
        input_output_aliases={2: 1},                              # acc in place
        compiler_params=cparams,
        cost_estimate=pl.CostEstimate(
            flops=2 * N_pad * N_pad * D_pad,
            transcendentals=0,
            bytes_accessed=(2 * N_pad * N_pad                     # bf16 adjacency
                            + 2 * n_row_tiles * N_pad * D_pad     # bf16 E re-reads
                            + 2 * N_pad * D_pad                   # bf16 E out
                            + 8 * N_pad * D_pad)),                # f32 acc in+out
    )

    prop_head_call = pl.pallas_call(
        functools.partial(_prop_head_kernel, inv_layers=inv_layers),
        out_shape=(
            jax.ShapeDtypeStruct((N_pad, D_pad), jnp.float32),    # e_mean
            jax.ShapeDtypeStruct((N_pad, C_pad), jnp.float32),    # scores
        ),
        grid=(n_row_tiles, n_k_tiles),
        in_specs=[
            pl.BlockSpec((tm, tk), lambda i, k: (i, k)),          # adjacency tile
            pl.BlockSpec((tk, D_pad), lambda i, k: (k, 0)),       # E k-slab
            pl.BlockSpec((tm, D_pad), lambda i, k: (i, 0)),       # acc row tile
            pl.BlockSpec((D_pad, C_pad), lambda i, k: (0, 0)),    # W^T resident
            pl.BlockSpec((1, C_pad), lambda i, k: (0, 0)),        # bias
        ],
        out_specs=(
            pl.BlockSpec((tm, D_pad), lambda i, k: (i, 0)),
            pl.BlockSpec((tm, C_pad), lambda i, k: (i, 0)),
        ),
        scratch_shapes=[pltpu.VMEM((tm, D_pad), jnp.float32)],
        compiler_params=cparams,
        cost_estimate=pl.CostEstimate(
            flops=2 * N_pad * N_pad * D_pad + 2 * N_pad * D_pad * C_pad,
            transcendentals=0,
            bytes_accessed=(2 * N_pad * N_pad
                            + 2 * n_row_tiles * N_pad * D_pad
                            + 4 * N_pad * D_pad                   # f32 acc in
                            + 2 * D_pad * C_pad                   # bf16 W^T
                            + 4 * N_pad * D_pad                   # f32 e_mean out
                            + 4 * N_pad * C_pad)),                # f32 scores out
    )

    e_cur = e0_p.astype(jnp.bfloat16)   # layer state carried as bf16 values
    acc = e0_p                          # layer-0 term of the mean, f32

    if n_layers >= 1:
        for _ in range(n_layers - 1):
            e_cur, acc = prop_call(adj_bf16, e_cur, acc)
        # Last layer: propagation fused with mean + linear head.
        e_mean_p, s_p = prop_head_call(adj_bf16, e_cur, acc, wt_bf16, b_p)
    else:
        head_call = pl.pallas_call(
            functools.partial(_head_kernel, inv_layers=inv_layers),
            out_shape=(
                jax.ShapeDtypeStruct((N_pad, D_pad), jnp.float32),
                jax.ShapeDtypeStruct((N_pad, C_pad), jnp.float32),
            ),
            grid=(n_row_tiles,),
            in_specs=[
                pl.BlockSpec((tm, D_pad), lambda i: (i, 0)),
                pl.BlockSpec((D_pad, C_pad), lambda i: (0, 0)),
                pl.BlockSpec((1, C_pad), lambda i: (0, 0)),
            ],
            out_specs=(
                pl.BlockSpec((tm, D_pad), lambda i: (i, 0)),
                pl.BlockSpec((tm, C_pad), lambda i: (i, 0)),
            ),
            compiler_params=pltpu.CompilerParams(
                dimension_semantics=("parallel",),
                vmem_limit_bytes=_VMEM_LIMIT_BYTES),
        )
        e_mean_p, s_p = head_call(acc, wt_bf16, b_p)

    e_mean = e_mean_p[:N, :D]
    scores = s_p[:N, :C]
    e_su, e_si = e_mean[:n_users], e_mean[n_users:]
    su, si = scores[:n_users], scores[n_users:]
    return e_su, e_si, su, si


def build_norm_adj(key, n_users, n_items):
    """Deterministic dense symmetric-normalized bipartite adjacency D^-1/2 A D^-1/2."""
    N = n_users + n_items
    r = (jax.random.uniform(key, (n_users, n_items)) < 0.3).astype(jnp.float32)
    A = jnp.zeros((N, N), jnp.float32)
    A = A.at[:n_users, n_users:].set(r)
    A = A.at[n_users:, :n_users].set(r.T)
    deg = jnp.maximum(A.sum(axis=1), 1.0)
    d_inv_sqrt = 1.0 / jnp.sqrt(deg)
    return A * d_inv_sqrt[:, None] * d_inv_sqrt[None, :]


if __name__ == "__main__":
    # Small shapes consistent with the module's __init__.
    n_users, n_items = 16, 16
    emb_size = 32
    n_layers = 2
    nb_classes = 8
    N = n_users + n_items

    key = jax.random.PRNGKey(0)
    k_adj, k_emb, k_w, k_b = jax.random.split(key, 4)

    norm_adj = build_norm_adj(k_adj, n_users, n_items)
    e0 = jax.random.normal(k_emb, (N, emb_size), jnp.float32) * 0.1
    fc_w = jax.random.normal(k_w, (nb_classes, emb_size), jnp.float32) * 0.1
    fc_b = jax.random.normal(k_b, (nb_classes,), jnp.float32) * 0.1

    e_su, e_si, su, si = semigcn_forward(
        norm_adj, e0, fc_w, fc_b, n_users=n_users, n_layers=n_layers)
    jax.block_until_ready((e_su, e_si, su, si))

    # Pure-f32 reference of the same semantics.  The kernels run the matmuls
    # in bf16 on the MXU (f32 accumulation), so tolerance is loosened.
    cur = e0
    acc = e0
    for _ in range(n_layers):
        cur = norm_adj @ cur
        acc = acc + cur
    e_mean = acc / (n_layers + 1)
    s_ref = e_mean @ fc_w.T + fc_b
    assert jnp.allclose(jnp.concatenate([e_su, e_si], 0), e_mean,
                        atol=1e-2, rtol=1e-2)
    assert jnp.allclose(jnp.concatenate([su, si], 0), s_ref,
                        atol=1e-2, rtol=1e-2)
    assert e_su.shape == (n_users, emb_size) and su.shape == (n_users, nb_classes)
    assert e_si.shape == (n_items, emb_size) and si.shape == (n_items, nb_classes)

    print("KERNEL_OK")
</pallas_src>

<mosaic_0001>
module attributes {stable_mosaic.version = 11 : i64} {
  func.func @_prop_kernel(%arg0: i32, %arg1: i32, %arg2: memref<128x128xbf16, #tpu.memory_space<vmem>>, %arg3: memref<128x128xbf16, #tpu.memory_space<vmem>>, %arg4: memref<128x128xf32, #tpu.memory_space<vmem>>, %arg5: memref<128x128xbf16, #tpu.memory_space<vmem>>, %arg6: memref<128x128xf32, #tpu.memory_space<vmem>>, %arg7: memref<128x128xf32, #tpu.memory_space<vmem>>) attributes {dimension_semantics = [#tpu.dimension_semantics<parallel>, #tpu.dimension_semantics<arbitrary>], iteration_bounds = array<i64: 1, 1>, scalar_prefetch = 0 : i64, scratch_operands = 1 : i64, tpu.core_type = #tpu.core_type<tc>, window_params = [{transform_indices = @transform_0, window_bounds = array<i64: 128, 128>}, {transform_indices = @transform_1, window_bounds = array<i64: 128, 128>}, {transform_indices = @transform_2, window_bounds = array<i64: 128, 128>}, {transform_indices = @transform_3, window_bounds = array<i64: 128, 128>}, {transform_indices = @transform_4, window_bounds = array<i64: 128, 128>}]} {
    %c0_i32 = arith.constant 0 : i32
    %0 = arith.cmpi eq, %arg1, %c0_i32 : i32
    %1 = arith.extui %0 : i1 to i32
    %c0_i32_0 = arith.constant 0 : i32
    %2 = arith.cmpi ne, %1, %c0_i32_0 : i32
    scf.if %2 {
      %cst_10 = arith.constant 0.000000e+00 : f32
      %12 = vector.broadcast %cst_10 : f32 to vector<128x128xf32>
      %c0_11 = arith.constant 0 : index
      %c0_12 = arith.constant 0 : index
      %13 = vector.load %arg7[%c0_11, %c0_12] : memref<128x128xf32, #tpu.memory_space<vmem>>, vector<128x128xf32>
      tpu.vector_store %arg7[%c0_11, %c0_12], %12 {strides = array<i32>} : memref<128x128xf32, #tpu.memory_space<vmem>>, vector<128x128xf32>,
    } else {
    }
    %c0 = arith.constant 0 : index
    %c0_1 = arith.constant 0 : index
    %3 = vector.load %arg7[%c0, %c0_1] : memref<128x128xf32, #tpu.memory_space<vmem>>, vector<128x128xf32>
    %c0_2 = arith.constant 0 : index
    %c0_3 = arith.constant 0 : index
    %4 = vector.load %arg2[%c0_2, %c0_3] : memref<128x128xbf16, #tpu.memory_space<vmem>>, vector<128x128xbf16>
    %c0_4 = arith.constant 0 : index
    %c0_5 = arith.constant 0 : index
    %5 = vector.load %arg3[%c0_4, %c0_5] : memref<128x128xbf16, #tpu.memory_space<vmem>>, vector<128x128xbf16>
    %cst = arith.constant dense<0.000000e+00> : vector<128x128xf32>
    %6 = tpu.matmul %4, %5, %cst {dimension_numbers = #tpu.dot_dimension_numbers<[1], [0], [0], [1], [0, 0, 1, 1], [], []>} : vector<128x128xbf16>, vector<128x128xbf16>, vector<128x128xf32> -> vector<128x128xf32>
    %7 = arith.addf %3, %6 : vector<128x128xf32>
    %c0_6 = arith.constant 0 : index
    %c0_7 = arith.constant 0 : index
    %8 = vector.load %arg7[%c0_6, %c0_7] : memref<128x128xf32, #tpu.memory_space<vmem>>, vector<128x128xf32>
    tpu.vector_store %arg7[%c0_6, %c0_7], %7 {strides = array<i32>} : memref<128x128xf32, #tpu.memory_space<vmem>>, vector<128x128xf32>,
    %c0_i32_8 = arith.constant 0 : i32
    %9 = arith.cmpi eq, %arg1, %c0_i32_8 : i32
    %10 = arith.extui %9 : i1 to i32
    %c0_i32_9 = arith.constant 0 : i32
    %11 = arith.cmpi ne, %10, %c0_i32_9 : i32
    scf.if %11 {
      %c0_10 = arith.constant 0 : index
      %c0_11 = arith.constant 0 : index
      %12 = vector.load %arg7[%c0_10, %c0_11] : memref<128x128xf32, #tpu.memory_space<vmem>>, vector<128x128xf32>
      %c0_12 = arith.constant 0 : index
      %c0_13 = arith.constant 0 : index
      %13 = vector.load %arg4[%c0_12, %c0_13] : memref<128x128xf32, #tpu.memory_space<vmem>>, vector<128x128xf32>
      %14 = arith.addf %13, %12 : vector<128x128xf32>
      %c0_14 = arith.constant 0 : index
      %c0_15 = arith.constant 0 : index
      %15 = vector.load %arg6[%c0_14, %c0_15] : memref<128x128xf32, #tpu.memory_space<vmem>>, vector<128x128xf32>
      tpu.vector_store %arg6[%c0_14, %c0_15], %14 {strides = array<i32>} : memref<128x128xf32, #tpu.memory_space<vmem>>, vector<128x128xf32>,
      %16 = arith.truncf %12 : vector<128x128xf32> to vector<128x128xbf16>
      %c0_16 = arith.constant 0 : index
      %c0_17 = arith.constant 0 : index
      %17 = vector.load %arg5[%c0_16, %c0_17] : memref<128x128xbf16, #tpu.memory_space<vmem>>, vector<128x128xbf16>
      tpu.vector_store %arg5[%c0_16, %c0_17], %16 {strides = array<i32>} : memref<128x128xbf16, #tpu.memory_space<vmem>>, vector<128x128xbf16>,
    } else {
    }
    return
  }
  func.func @transform_0(%arg0: i32, %arg1: i32) -> (i32, i32) {
    %c0_i32 = arith.constant 0 : i32
    return %arg0, %arg1 : i32, i32
  }
  func.func @transform_1(%arg0: i32, %arg1: i32) -> (i32, i32) {
    %c0_i32 = arith.constant 0 : i32
    %c0_i32_0 = arith.constant 0 : i32
    return %arg1, %c0_i32 : i32, i32
  }
  func.func @transform_2(%arg0: i32, %arg1: i32) -> (i32, i32) {
    %c0_i32 = arith.constant 0 : i32
    %c0_i32_0 = arith.constant 0 : i32
    return %arg0, %c0_i32 : i32, i32
  }
  func.func @transform_3(%arg0: i32, %arg1: i32) -> (i32, i32) {
    %c0_i32 = arith.constant 0 : i32
    %c0_i32_0 = arith.constant 0 : i32
    return %arg0, %c0_i32 : i32, i32
  }
  func.func @transform_4(%arg0: i32, %arg1: i32) -> (i32, i32) {
    %c0_i32 = arith.constant 0 : i32
    %c0_i32_0 = arith.constant 0 : i32
    return %arg0, %c0_i32 : i32, i32
  }
}

</mosaic_0001>

<llo_original>
// kernel: tpu_custom_call.1
$region0: #{tpu_custom_call.1}
  #allocation0 [shape = 'u32[]', space=smem, size = 0x4, offset = 0x4, fixed_abs, tag = 'smem constant byte address 0x4 - core index']
  #allocation1 [shape = 'u32[144,128]{1,0:T(1,128)}', space=vmem, size = 0x12000, scoped, tag = 'internal scratch']
  #allocation2 [shape = 'f32[128,128]{1,0:T(8,128)}', space=vmem, size = 0x10000, scoped, tag = 'scratch operand']
  %s0 = inlined_call_operand.vmem [shape: bf16[128,128], index: 0, kind: input, shape index: {}]
  %s1 = inlined_call_operand.vmem [shape: bf16[128,128], index: 1, kind: input, shape index: {}]
  %s2 = inlined_call_operand.hbm [shape: f32[128,128], index: 2, kind: input, shape index: {}, may-alias: {2,4}]
  %s3 = inlined_call_operand.hbm [shape: bf16[128,128], index: 3, kind: output, shape index: {0}]
  %s4 = inlined_call_operand.hbm [shape: f32[128,128], index: 4, kind: output, shape index: {1}, may-alias: {2,4}]
  %5 = xla_tuple %s3, %s4
  %s6 = sld [smem:[#allocation0]]
  $region42: #{tpu_custom_call.1} parent=0
    _
  %s8 = ssub.s32 1, %s6
  %s9 = scalar_select 0, %s8, %s6
  $region1: #{tpu_custom_call.1} parent=0
    #allocation3 [shape = 'u8[65536]{0}', space=vmem, size = 0x10000, scoped, tag = 'input window, operand 2, single buffered']
    #allocation4 [shape = 's32[1]{0}', space=sflag, size = 0x4, scoped, tag = 'scoped memory for tpu_custom_call.1']
    #allocation5 [shape = 's32[1]{0}', space=sflag, size = 0x4, scoped, tag = 'scoped memory for tpu_custom_call.1']
    #allocation6 [shape = 'u8[32768]{0}', space=vmem, size = 0x8000, scoped, tag = 'output window, operand 0, single buffered']
    #allocation7 [shape = 'u8[65536]{0}', space=vmem, size = 0x10000, scoped, tag = 'output window, operand 1, single buffered']
    #allocation8 [shape = 's32[1]{0}', space=sflag, size = 0x4, scoped, tag = 'scoped memory for tpu_custom_call.1']
    %10 = vsyncpa [#allocation4], 0
    %11 = vsyncpa [#allocation5], 0
    %12 = vsyncpa [#allocation8], 0
    // Predicated region
    $region2: #{tpu_custom_call.1} parent=1 // pred_check
      _
    $region3: #{tpu_custom_call.1} parent=1 // pred_check_branch
      %14 = sbr.rel (0) target = $region5
    $region4: #{tpu_custom_call.1} parent=1 // pred_region
      _
    $region5: #{tpu_custom_call.1} parent=1 // pred_fallthru
      _
    // Predicated region
    $region6: #{tpu_custom_call.1} parent=1 // pred_check
      _
    $region7: #{tpu_custom_call.1} parent=1 // pred_check_branch
      %16 = sbr.rel (0) target = $region9
    $region8: #{tpu_custom_call.1} parent=1 // pred_region
      _
    $region9: #{tpu_custom_call.1} parent=1 // pred_fallthru
      _
    // Predicated region
    $region10: #{tpu_custom_call.1} parent=1 // pred_check
      _
    $region11: #{tpu_custom_call.1} parent=1 // pred_check_branch
      %18 = sbr.rel (0) target = $region13
    $region12: #{tpu_custom_call.1} parent=1 // pred_region
      %s20 = ssub.s32 2048, 2048
      %21 = vsyncadd [#allocation4], %s20
      %s22 = sshll.u32 [#allocation3], 4
      %s23 = int_to_ptr.vmem [resolvable:$true] %s22
      %28 = dma.hbm_to_vmem [thread:$0]  %s2, 2048, %s23, [#allocation4], 128, 128, 8
    $region13: #{tpu_custom_call.1} parent=1 // pred_fallthru
      _
    // Predicated region
    $region14: #{tpu_custom_call.1} parent=1 // pred_check
      _
    $region15: #{tpu_custom_call.1} parent=1 // pred_check_branch
      %30 = sbr.rel (0) target = $region17
    $region16: #{tpu_custom_call.1} parent=1 // pred_region
      %31 = dma.done [#allocation4], 2048
    $region17: #{tpu_custom_call.1} parent=1 // pred_fallthru
      _
    %p33 = scmp.eq.s32.totalorder 0, 0
    // Predicated region
    $region18: #{tpu_custom_call.1} parent=1 // pred_check
      %p34 = pneg %p33
    $region19: #{tpu_custom_call.1} parent=1 // pred_check_branch
      %36 = sbr.rel (%p34) target = $region21
    $region20: #{tpu_custom_call.1} parent=1 // pred_region
      %37 = vst [vmem:[#allocation2] sm:$0xff] 0.0
      %38 = vst [vmem:[#allocation2 + $0x8] sm:$0xff] 0.0
      %39 = vst [vmem:[#allocation2 + $0x10] sm:$0xff] 0.0
      %40 = vst [vmem:[#allocation2 + $0x18] sm:$0xff] 0.0
      %41 = vst [vmem:[#allocation2 + $0x20] sm:$0xff] 0.0
      %42 = vst [vmem:[#allocation2 + $0x28] sm:$0xff] 0.0
      %43 = vst [vmem:[#allocation2 + $0x30] sm:$0xff] 0.0
      %44 = vst [vmem:[#allocation2 + $0x38] sm:$0xff] 0.0
      %45 = vst [vmem:[#allocation2 + $0x40] sm:$0xff] 0.0
      %46 = vst [vmem:[#allocation2 + $0x48] sm:$0xff] 0.0
      %47 = vst [vmem:[#allocation2 + $0x50] sm:$0xff] 0.0
      %48 = vst [vmem:[#allocation2 + $0x58] sm:$0xff] 0.0
      %49 = vst [vmem:[#allocation2 + $0x60] sm:$0xff] 0.0
      %50 = vst [vmem:[#allocation2 + $0x68] sm:$0xff] 0.0
      %51 = vst [vmem:[#allocation2 + $0x70] sm:$0xff] 0.0
      %52 = vst [vmem:[#allocation2 + $0x78] sm:$0xff] 0.0
    $region21: #{tpu_custom_call.1} parent=1 // pred_fallthru
      _
    %v53 = vld [vmem:[#allocation2] sm:$0xff]
    %v54 = vld [vmem:[#allocation2 + $0x8] sm:$0xff]
    %v55 = vld [vmem:[#allocation2 + $0x10] sm:$0xff]
    %v56 = vld [vmem:[#allocation2 + $0x18] sm:$0xff]
    %v57 = vld [vmem:[#allocation2 + $0x20] sm:$0xff]
    %v58 = vld [vmem:[#allocation2 + $0x28] sm:$0xff]
    %v59 = vld [vmem:[#allocation2 + $0x30] sm:$0xff]
    %v60 = vld [vmem:[#allocation2 + $0x38] sm:$0xff]
    %v61 = vld [vmem:[#allocation2 + $0x40] sm:$0xff]
    %v62 = vld [vmem:[#allocation2 + $0x48] sm:$0xff]
    %v63 = vld [vmem:[#allocation2 + $0x50] sm:$0xff]
    %v64 = vld [vmem:[#allocation2 + $0x58] sm:$0xff]
    %v65 = vld [vmem:[#allocation2 + $0x60] sm:$0xff]
    %v66 = vld [vmem:[#allocation2 + $0x68] sm:$0xff]
    %v67 = vld [vmem:[#allocation2 + $0x70] sm:$0xff]
    %v68 = vld [vmem:[#allocation2 + $0x78] sm:$0xff]
    %v69 = vld [vmem:[%s0] sm:$0xf]
    %v70 = vld [vmem:[%s0 + $0x4] sm:$0xf]
    %v71 = vld [vmem:[%s0 + $0x8] sm:$0xf]
    %v72 = vld [vmem:[%s0 + $0xc] sm:$0xf]
    %v73 = vld [vmem:[%s0 + $0x10] sm:$0xf]
    %v74 = vld [vmem:[%s0 + $0x14] sm:$0xf]
    %v75 = vld [vmem:[%s0 + $0x18] sm:$0xf]
    %v76 = vld [vmem:[%s0 + $0x1c] sm:$0xf]
    %v77 = vld [vmem:[%s0 + $0x20] sm:$0xf]
    %v78 = vld [vmem:[%s0 + $0x24] sm:$0xf]
    %v79 = vld [vmem:[%s0 + $0x28] sm:$0xf]
    %v80 = vld [vmem:[%s0 + $0x2c] sm:$0xf]
    %v81 = vld [vmem:[%s0 + $0x30] sm:$0xf]
    %v82 = vld [vmem:[%s0 + $0x34] sm:$0xf]
    %v83 = vld [vmem:[%s0 + $0x38] sm:$0xf]
    %v84 = vld [vmem:[%s0 + $0x3c] sm:$0xf]
    %v85 = vld [vmem:[%s1] sm:$0xf]
    %v86 = vld [vmem:[%s1 + $0x4] sm:$0xf]
    %v87 = vld [vmem:[%s1 + $0x8] sm:$0xf]
    %v88 = vld [vmem:[%s1 + $0xc] sm:$0xf]
    %v89 = vld [vmem:[%s1 + $0x10] sm:$0xf]
    %v90 = vld [vmem:[%s1 + $0x14] sm:$0xf]
    %v91 = vld [vmem:[%s1 + $0x18] sm:$0xf]
    %v92 = vld [vmem:[%s1 + $0x1c] sm:$0xf]
    %v93 = vld [vmem:[%s1 + $0x20] sm:$0xf]
    %v94 = vld [vmem:[%s1 + $0x24] sm:$0xf]
    %v95 = vld [vmem:[%s1 + $0x28] sm:$0xf]
    %v96 = vld [vmem:[%s1 + $0x2c] sm:$0xf]
    %v97 = vld [vmem:[%s1 + $0x30] sm:$0xf]
    %v98 = vld [vmem:[%s1 + $0x34] sm:$0xf]
    %v99 = vld [vmem:[%s1 + $0x38] sm:$0xf]
    %v100 = vld [vmem:[%s1 + $0x3c] sm:$0xf]
    %v117 = vunpack.c.l.b16 %v69
    %v118 = vunpack.c.l.b16 %v70
    %v119 = vunpack.c.l.b16 %v71
    %v120 = vunpack.c.l.b16 %v72
    %v121 = vunpack.c.l.b16 %v73
    %v122 = vunpack.c.l.b16 %v74
    %v123 = vunpack.c.l.b16 %v75
    %v124 = vunpack.c.l.b16 %v76
    %v125 = vunpack.c.l.b16 %v77
    %v126 = vunpack.c.l.b16 %v78
    %v127 = vunpack.c.l.b16 %v79
    %v128 = vunpack.c.l.b16 %v80
    %v129 = vunpack.c.l.b16 %v81
    %v130 = vunpack.c.l.b16 %v82
    %v131 = vunpack.c.l.b16 %v83
    %v132 = vunpack.c.l.b16 %v84
    %v133 = vpack.c.b16 %v118, %v117
    %v134 = vpack.c.b16 %v120, %v119
    %v135 = vpack.c.b16 %v122, %v121
    %v136 = vpack.c.b16 %v124, %v123
    %v137 = vpack.c.b16 %v126, %v125
    %v138 = vpack.c.b16 %v128, %v127
    %v139 = vpack.c.b16 %v130, %v129
    %v140 = vpack.c.b16 %v132, %v131
    %v165 = vunpack.c.l.b16 %v85
    %v166 = vunpack.c.l.b16 %v86
    %v167 = vunpack.c.l.b16 %v87
    %v168 = vunpack.c.l.b16 %v88
    %v169 = vunpack.c.l.b16 %v89
    %v170 = vunpack.c.l.b16 %v90
    %v171 = vunpack.c.l.b16 %v91
    %v172 = vunpack.c.l.b16 %v92
    %v173 = vunpack.c.l.b16 %v93
    %v174 = vunpack.c.l.b16 %v94
    %v175 = vunpack.c.l.b16 %v95
    %v176 = vunpack.c.l.b16 %v96
    %v177 = vunpack.c.l.b16 %v97
    %v178 = vunpack.c.l.b16 %v98
    %v179 = vunpack.c.l.b16 %v99
    %v180 = vunpack.c.l.b16 %v100
    %v181 = vpack.c.b16 %v166, %v165
    %v182 = vpack.c.b16 %v168, %v167
    %v183 = vpack.c.b16 %v170, %v169
    %v184 = vpack.c.b16 %v172, %v171
    %v185 = vpack.c.b16 %v174, %v173
    %v186 = vpack.c.b16 %v176, %v175
    %v187 = vpack.c.b16 %v178, %v177
    %v188 = vpack.c.b16 %v180, %v179
    %197 = vmatprep.subr.bf16.mxu0 0
    %198 = vmatpush1.bf16.msra.mxu0 %v188
    %199 = vmatprep.subr.bf16.mxu0 0
    %200 = vmatpush1.bf16.msra.mxu0 %v187
    %201 = vmatprep.subr.bf16.mxu0 0
    %202 = vmatpush1.bf16.msra.mxu0 %v186
    %203 = vmatprep.subr.bf16.mxu0 0
    %204 = vmatpush1.bf16.msra.mxu0 %v185
    %205 = vmatprep.subr.bf16.mxu0 0
    %206 = vmatpush1.bf16.msra.mxu0 %v184
    %207 = vmatprep.subr.bf16.mxu0 0
    %208 = vmatpush1.bf16.msra.mxu0 %v183
    %209 = vmatprep.subr.bf16.mxu0 0
    %210 = vmatpush1.bf16.msra.mxu0 %v182
    %211 = vmatprep.subr.bf16.mxu0 0
    %212 = vmatpush1.bf16.msra.mxu0 %v181
    %213 = vmatprep.subr.bf16.mxu0 0
    %214 = vmatpush2.bf16.msra.mxu0 0
    %215 = vmatprep.subr.bf16.mxu0 0
    %216 = vmatpush2.bf16.msra.mxu0 0
    %217 = vmatprep.subr.bf16.mxu0 0
    %218 = vmatpush2.bf16.msra.mxu0 0
    %219 = vmatprep.subr.bf16.mxu0 0
    %220 = vmatpush2.bf16.msra.mxu0 0
    %221 = vmatprep.subr.bf16.mxu0 0
    %222 = vmatpush2.bf16.msra.mxu0 0
    %223 = vmatprep.subr.bf16.mxu0 0
    %224 = vmatpush2.bf16.msra.mxu0 0
    %225 = vmatprep.subr.bf16.mxu0 0
    %226 = vmatpush2.bf16.msra.mxu0 0
    %227 = vmatprep.subr.bf16.mxu0 0
    %228 = vmatpush2.bf16.msra.mxu0 0
    %229 = vmatprep.mubr.bf16.mxu0 0
    %230 = vmatmul.mubr.bf16.gmra.mxu0 %v133
    %v231 = vpop.f32.mrf.mxu0
    %v232 = vadd.f32 0.0, %v231
    %v233 = vpop.f32.mrf.mxu0
    %v234 = vpop.f32.mrf.mxu0
    %v235 = vadd.f32 0.0, %v234
    %v236 = vpop.f32.mrf.mxu0
    %237 = vmatprep.mubr.bf16.mxu0 0
    %238 = vmatmul.mubr.bf16.gmra.mxu0 %v134
    %v239 = vpop.f32.mrf.mxu0
    %v240 = vadd.f32 0.0, %v239
    %v241 = vpop.f32.mrf.mxu0
    %v242 = vpop.f32.mrf.mxu0
    %v243 = vadd.f32 0.0, %v242
    %v244 = vpop.f32.mrf.mxu0
    %245 = vmatprep.mubr.bf16.mxu0 0
    %246 = vmatmul.mubr.bf16.gmra.mxu0 %v135
    %v247 = vpop.f32.mrf.mxu0
    %v248 = vadd.f32 0.0, %v247
    %v249 = vpop.f32.mrf.mxu0
    %v250 = vpop.f32.mrf.mxu0
    %v251 = vadd.f32 0.0, %v250
    %v252 = vpop.f32.mrf.mxu0
    %253 = vmatprep.mubr.bf16.mxu0 0
    %254 = vmatmul.mubr.bf16.gmra.mxu0 %v136
    %v255 = vpop.f32.mrf.mxu0
    %v256 = vadd.f32 0.0, %v255
    %v257 = vpop.f32.mrf.mxu0
    %v258 = vpop.f32.mrf.mxu0
    %v259 = vadd.f32 0.0, %v258
    %v260 = vpop.f32.mrf.mxu0
    %261 = vmatprep.mubr.bf16.mxu0 0
    %262 = vmatmul.mubr.bf16.gmra.mxu0 %v137
    %v263 = vpop.f32.mrf.mxu0
    %v264 = vadd.f32 0.0, %v263
    %v265 = vpop.f32.mrf.mxu0
    %v266 = vpop.f32.mrf.mxu0
    %v267 = vadd.f32 0.0, %v266
    %v268 = vpop.f32.mrf.mxu0
    %269 = vmatprep.mubr.bf16.mxu0 0
    %270 = vmatmul.mubr.bf16.gmra.mxu0 %v138
    %v271 = vpop.f32.mrf.mxu0
    %v272 = vadd.f32 0.0, %v271
    %v273 = vpop.f32.mrf.mxu0
    %v274 = vpop.f32.mrf.mxu0
    %v275 = vadd.f32 0.0, %v274
    %v276 = vpop.f32.mrf.mxu0
    %277 = vmatprep.mubr.bf16.mxu0 0
    %278 = vmatmul.mubr.bf16.gmra.mxu0 %v139
    %v279 = vpop.f32.mrf.mxu0
    %v280 = vadd.f32 0.0, %v279
    %v281 = vpop.f32.mrf.mxu0
    %v282 = vpop.f32.mrf.mxu0
    %v283 = vadd.f32 0.0, %v282
    %v284 = vpop.f32.mrf.mxu0
    %285 = vmatprep.mubr.bf16.mxu0 0
    %286 = vmatmul.mubr.bf16.gmra.mxu0 %v140
    %v287 = vpop.f32.mrf.mxu0
    %v288 = vadd.f32 0.0, %v287
    %v289 = vpop.f32.mrf.mxu0
    %v290 = vpop.f32.mrf.mxu0
    %v291 = vadd.f32 0.0, %v290
    %v292 = vpop.f32.mrf.mxu0
    %293 = vdwg.mxu0
    %v294 = vadd.f32 %v53, %v232
    %v295 = vadd.f32 %v54, %v235
    %v296 = vadd.f32 %v55, %v240
    %v297 = vadd.f32 %v56, %v243
    %v298 = vadd.f32 %v57, %v248
    %v299 = vadd.f32 %v58, %v251
    %v300 = vadd.f32 %v59, %v256
    %v301 = vadd.f32 %v60, %v259
    %v302 = vadd.f32 %v61, %v264
    %v303 = vadd.f32 %v62, %v267
    %v304 = vadd.f32 %v63, %v272
    %v305 = vadd.f32 %v64, %v275
    %v306 = vadd.f32 %v65, %v280
    %v307 = vadd.f32 %v66, %v283
    %v308 = vadd.f32 %v67, %v288
    %v309 = vadd.f32 %v68, %v291
    %310 = vst [vmem:[#allocation2] sm:$0xff] %v294
    %311 = vst [vmem:[#allocation2 + $0x8] sm:$0xff] %v295
    %312 = vst [vmem:[#allocation2 + $0x10] sm:$0xff] %v296
    %313 = vst [vmem:[#allocation2 + $0x18] sm:$0xff] %v297
    %314 = vst [vmem:[#allocation2 + $0x20] sm:$0xff] %v298
    %315 = vst [vmem:[#allocation2 + $0x28] sm:$0xff] %v299
    %316 = vst [vmem:[#allocation2 + $0x30] sm:$0xff] %v300
    %317 = vst [vmem:[#allocation2 + $0x38] sm:$0xff] %v301
    %318 = vst [vmem:[#allocation2 + $0x40] sm:$0xff] %v302
    %319 = vst [vmem:[#allocation2 + $0x48] sm:$0xff] %v303
    %320 = vst [vmem:[#allocation2 + $0x50] sm:$0xff] %v304
    %321 = vst [vmem:[#allocation2 + $0x58] sm:$0xff] %v305
    %322 = vst [vmem:[#allocation2 + $0x60] sm:$0xff] %v306
    %323 = vst [vmem:[#allocation2 + $0x68] sm:$0xff] %v307
    %324 = vst [vmem:[#allocation2 + $0x70] sm:$0xff] %v308
    %325 = vst [vmem:[#allocation2 + $0x78] sm:$0xff] %v309
    // Predicated region
    $region22: #{tpu_custom_call.1} parent=1 // pred_check
      %p326 = pneg %p33
    $region23: #{tpu_custom_call.1} parent=1 // pred_check_branch
      %328 = sbr.rel (%p326) target = $region25
    $region24: #{tpu_custom_call.1} parent=1 // pred_region
      %v329 = vld [vmem:[#allocation2] sm:$0xff]
      %v330 = vld [vmem:[#allocation2 + $0x8] sm:$0xff]
      %v331 = vld [vmem:[#allocation2 + $0x10] sm:$0xff]
      %v332 = vld [vmem:[#allocation2 + $0x18] sm:$0xff]
      %v333 = vld [vmem:[#allocation2 + $0x20] sm:$0xff]
      %v334 = vld [vmem:[#allocation2 + $0x28] sm:$0xff]
      %v335 = vld [vmem:[#allocation2 + $0x30] sm:$0xff]
      %v336 = vld [vmem:[#allocation2 + $0x38] sm:$0xff]
      %v337 = vld [vmem:[#allocation2 + $0x40] sm:$0xff]
      %v338 = vld [vmem:[#allocation2 + $0x48] sm:$0xff]
      %v339 = vld [vmem:[#allocation2 + $0x50] sm:$0xff]
      %v340 = vld [vmem:[#allocation2 + $0x58] sm:$0xff]
      %v341 = vld [vmem:[#allocation2 + $0x60] sm:$0xff]
      %v342 = vld [vmem:[#allocation2 + $0x68] sm:$0xff]
      %v343 = vld [vmem:[#allocation2 + $0x70] sm:$0xff]
      %v344 = vld [vmem:[#allocation2 + $0x78] sm:$0xff]
      %v345 = vld [vmem:[#allocation3] sm:$0xff]
      %v346 = vld [vmem:[#allocation3 + $0x8] sm:$0xff]
      %v347 = vld [vmem:[#allocation3 + $0x10] sm:$0xff]
      %v348 = vld [vmem:[#allocation3 + $0x18] sm:$0xff]
      %v349 = vld [vmem:[#allocation3 + $0x20] sm:$0xff]
      %v350 = vld [vmem:[#allocation3 + $0x28] sm:$0xff]
      %v351 = vld [vmem:[#allocation3 + $0x30] sm:$0xff]
      %v352 = vld [vmem:[#allocation3 + $0x38] sm:$0xff]
      %v353 = vld [vmem:[#allocation3 + $0x40] sm:$0xff]
      %v354 = vld [vmem:[#allocation3 + $0x48] sm:$0xff]
      %v355 = vld [vmem:[#allocation3 + $0x50] sm:$0xff]
      %v356 = vld [vmem:[#allocation3 + $0x58] sm:$0xff]
      %v357 = vld [vmem:[#allocation3 + $0x60] sm:$0xff]
      %v358 = vld [vmem:[#allocation3 + $0x68] sm:$0xff]
      %v359 = vld [vmem:[#allocation3 + $0x70] sm:$0xff]
      %v360 = vld [vmem:[#allocation3 + $0x78] sm:$0xff]
      %v361 = vadd.f32 %v345, %v329
      %v362 = vadd.f32 %v346, %v330
      %v363 = vadd.f32 %v347, %v331
      %v364 = vadd.f32 %v348, %v332
      %v365 = vadd.f32 %v349, %v333
      %v366 = vadd.f32 %v350, %v334
      %v367 = vadd.f32 %v351, %v335
      %v368 = vadd.f32 %v352, %v336
      %v369 = vadd.f32 %v353, %v337
      %v370 = vadd.f32 %v354, %v338
      %v371 = vadd.f32 %v355, %v339
      %v372 = vadd.f32 %v356, %v340
      %v373 = vadd.f32 %v357, %v341
      %v374 = vadd.f32 %v358, %v342
      %v375 = vadd.f32 %v359, %v343
      %v376 = vadd.f32 %v360, %v344
      %377 = vst [vmem:[#allocation7] sm:$0xff] %v361
      %378 = vst [vmem:[#allocation7 + $0x8] sm:$0xff] %v362
      %379 = vst [vmem:[#allocation7 + $0x10] sm:$0xff] %v363
      %380 = vst [vmem:[#allocation7 + $0x18] sm:$0xff] %v364
      %381 = vst [vmem:[#allocation7 + $0x20] sm:$0xff] %v365
      %382 = vst [vmem:[#allocation7 + $0x28] sm:$0xff] %v366
      %383 = vst [vmem:[#allocation7 + $0x30] sm:$0xff] %v367
      %384 = vst [vmem:[#allocation7 + $0x38] sm:$0xff] %v368
      %385 = vst [vmem:[#allocation7 + $0x40] sm:$0xff] %v369
      %386 = vst [vmem:[#allocation7 + $0x48] sm:$0xff] %v370
      %387 = vst [vmem:[#allocation7 + $0x50] sm:$0xff] %v371
      %388 = vst [vmem:[#allocation7 + $0x58] sm:$0xff] %v372
      %389 = vst [vmem:[#allocation7 + $0x60] sm:$0xff] %v373
      %390 = vst [vmem:[#allocation7 + $0x68] sm:$0xff] %v374
      %391 = vst [vmem:[#allocation7 + $0x70] sm:$0xff] %v375
      %392 = vst [vmem:[#allocation7 + $0x78] sm:$0xff] %v376
      %v393 = vpack.c.bf16 %v330, %v329
      %v394 = vpack.c.bf16 %v332, %v331
      %v395 = vpack.c.bf16 %v334, %v333
      %v396 = vpack.c.bf16 %v336, %v335
      %v397 = vpack.c.bf16 %v338, %v337
      %v398 = vpack.c.bf16 %v340, %v339
      %v399 = vpack.c.bf16 %v342, %v341
      %v400 = vpack.c.bf16 %v344, %v343
      %v409 = vunpack.c.l.b16 %v393
      %v410 = vunpack.c.h.b16 %v393
      %v411 = vunpack.c.l.b16 %v394
      %v412 = vunpack.c.h.b16 %v394
      %v413 = vunpack.c.l.b16 %v395
      %v414 = vunpack.c.h.b16 %v395
      %v415 = vunpack.c.l.b16 %v396
      %v416 = vunpack.c.h.b16 %v396
      %v417 = vunpack.c.l.b16 %v397
      %v418 = vunpack.c.h.b16 %v397
      %v419 = vunpack.c.l.b16 %v398
      %v420 = vunpack.c.h.b16 %v398
      %v421 = vunpack.c.l.b16 %v399
      %v422 = vunpack.c.h.b16 %v399
      %v423 = vunpack.c.l.b16 %v400
      %v424 = vunpack.c.h.b16 %v400
      %v425 = vpack.c.b16 %v409, %v409
      %v426 = vpack.c.b16 %v410, %v410
      %v427 = vpack.c.b16 %v411, %v411
      %v428 = vpack.c.b16 %v412, %v412
      %v429 = vpack.c.b16 %v413, %v413
      %v430 = vpack.c.b16 %v414, %v414
      %v431 = vpack.c.b16 %v415, %v415
      %v432 = vpack.c.b16 %v416, %v416
      %v433 = vpack.c.b16 %v417, %v417
      %v434 = vpack.c.b16 %v418, %v418
      %v435 = vpack.c.b16 %v419, %v419
      %v436 = vpack.c.b16 %v420, %v420
      %v437 = vpack.c.b16 %v421, %v421
      %v438 = vpack.c.b16 %v422, %v422
      %v439 = vpack.c.b16 %v423, %v423
      %v440 = vpack.c.b16 %v424, %v424
      %457 = vst [vmem:[#allocation6] sm:$0xf] %v425
      %458 = vst [vmem:[#allocation6 + $0x4] sm:$0xf] %v426
      %459 = vst [vmem:[#allocation6 + $0x8] sm:$0xf] %v427
      %460 = vst [vmem:[#allocation6 + $0xc] sm:$0xf] %v428
      %461 = vst [vmem:[#allocation6 + $0x10] sm:$0xf] %v429
      %462 = vst [vmem:[#allocation6 + $0x14] sm:$0xf] %v430
      %463 = vst [vmem:[#allocation6 + $0x18] sm:$0xf] %v431
      %464 = vst [vmem:[#allocation6 + $0x1c] sm:$0xf] %v432
      %465 = vst [vmem:[#allocation6 + $0x20] sm:$0xf] %v433
      %466 = vst [vmem:[#allocation6 + $0x24] sm:$0xf] %v434
      %467 = vst [vmem:[#allocation6 + $0x28] sm:$0xf] %v435
      %468 = vst [vmem:[#allocation6 + $0x2c] sm:$0xf] %v436
      %469 = vst [vmem:[#allocation6 + $0x30] sm:$0xf] %v437
      %470 = vst [vmem:[#allocation6 + $0x34] sm:$0xf] %v438
      %471 = vst [vmem:[#allocation6 + $0x38] sm:$0xf] %v439
      %472 = vst [vmem:[#allocation6 + $0x3c] sm:$0xf] %v440
    $region25: #{tpu_custom_call.1} parent=1 // pred_fallthru
      _
    // Predicated region
    $region26: #{tpu_custom_call.1} parent=1 // pred_check
      _
    $region27: #{tpu_custom_call.1} parent=1 // pred_check_branch
      %474 = sbr.rel (0) target = $region29
    $region28: #{tpu_custom_call.1} parent=1 // pred_region
      %s476 = ssub.s32 1024, 1024
      %477 = vsyncadd [#allocation5], %s476
      %s478 = sshll.u32 [#allocation6], 4
      %s479 = int_to_ptr.vmem [resolvable:$true] %s478
      %484 = dma.vmem_to_hbm [thread:$0]  %s479, 1024, %s3, [#allocation5], 64, 64, 4
    $region29: #{tpu_custom_call.1} parent=1 // pred_fallthru
      _
    // Predicated region
    $region30: #{tpu_custom_call.1} parent=1 // pred_check
      _
    $region31: #{tpu_custom_call.1} parent=1 // pred_check_branch
      %486 = sbr.rel (0) target = $region33
    $region32: #{tpu_custom_call.1} parent=1 // pred_region
      %s488 = ssub.s32 2048, 2048
      %489 = vsyncadd [#allocation8], %s488
      %s490 = sshll.u32 [#allocation7], 4
      %s491 = int_to_ptr.vmem [resolvable:$true] %s490
      %496 = dma.vmem_to_hbm [thread:$0]  %s491, 2048, %s4, [#allocation8], 128, 128, 8
    $region33: #{tpu_custom_call.1} parent=1 // pred_fallthru
      _
    // Predicated region
    $region34: #{tpu_custom_call.1} parent=1 // pred_check
      _
    $region35: #{tpu_custom_call.1} parent=1 // pred_check_branch
      %498 = sbr.rel (0) target = $region37
    $region36: #{tpu_custom_call.1} parent=1 // pred_region
      %499 = dma.done [#allocation5], 1024
    $region37: #{tpu_custom_call.1} parent=1 // pred_fallthru
      _
    // Predicated region
    $region38: #{tpu_custom_call.1} parent=1 // pred_check
      _
    $region39: #{tpu_custom_call.1} parent=1 // pred_check_branch
      %501 = sbr.rel (0) target = $region41
    $region40: #{tpu_custom_call.1} parent=1 // pred_region
      %502 = dma.done [#allocation8], 2048
    $region41: #{tpu_custom_call.1} parent=1 // pred_fallthru
      _
    %503 = vsyncpa [#allocation4], 1
    %504 = vsyncpa [#allocation5], 1
    %505 = vsyncpa [#allocation8], 1

</llo_original>
